<compile_context>
chip_gen: v7x
topology: tpu7x:2x2x1
jax: 0.10.0
libtpu: 0.0.40
codegen_flags: <defaults>
</compile_context>

<pallas_src>
import jax
import jax.numpy as jnp
from jax.experimental import pallas as pl
from jax.experimental.pallas import tpu as pltpu


_TARGET_X_BYTES_PER_STEP = 4 << 20   # aim for ~4 MiB of x per grid step
_TILE_VMEM_BUDGET = 24 << 20         # all double-buffered tiles must fit in this


def _round_up(x, m):
    return ((x + m - 1) // m) * m


def _pick_tiles(m, k, n, itemsize):
    """Choose (TM, TK) from bytes-per-step and a VMEM tile budget."""
    sublane = 32 // itemsize  # 16 for bf16, 8 for f32

    # --- K tile: keep full K unless it is large; only tile with an exact divisor
    #     (multiple of 128) so the reduction never reads an overhanging K block.
    tk = k
    if k > 2048:
        for cand in (2048, 1024, 512, 256, 128):
            if k % cand == 0:
                tk = cand
                break

    # --- M tile: target ~4 MiB of x per step, clamp to the VMEM tile budget.
    tm = max(_TARGET_X_BYTES_PER_STEP // (tk * itemsize), sublane)

    def tile_bytes(tm_):
        return (2 * tm_ * tk * itemsize      # x, double-buffered
                + 2 * tk * n * itemsize      # w (worst case double-buffered)
                + 2 * tm_ * n * itemsize     # out, double-buffered
                + tm_ * n * 4)               # f32 accumulator scratch

    while tm > sublane and tile_bytes(tm) > _TILE_VMEM_BUDGET:
        tm //= 2
    tm = max(tm, sublane)

    if tm >= m:
        if m >= 1024:
            # v7x megacore: split so the "parallel" M axis feeds both TensorCores.
            tm = _round_up(pl.cdiv(m, 2), sublane)
        else:
            tm = m  # single full-extent block; splitting tiny M only adds overhead
    else:
        tm = _round_up(tm, sublane)
    return tm, tk


def _proj_kernel_fullk(x_ref, w_ref, o_ref):
    # x_ref: (TM, K), w_ref: (K, N) pre-transposed weight, o_ref: (TM, N)
    o_ref[...] = jnp.dot(
        x_ref[...], w_ref[...], preferred_element_type=jnp.float32
    ).astype(o_ref.dtype)


def _proj_kernel_ktiled(x_ref, w_ref, o_ref, acc_ref):
    kk = pl.program_id(1)

    @pl.when(kk == 0)
    def _():
        acc_ref[...] = jnp.zeros_like(acc_ref)

    acc_ref[...] += jnp.dot(
        x_ref[...], w_ref[...], preferred_element_type=jnp.float32
    )

    @pl.when(kk == pl.num_programs(1) - 1)
    def _():
        o_ref[...] = acc_ref[...].astype(o_ref.dtype)


def score_projection(pos, weight, *, compute_dtype=jnp.bfloat16):
    """pos: [..., input_dim], weight: [output_dim, input_dim] (PyTorch layout)."""
    *lead, input_dim = pos.shape
    output_dim, k_w = weight.shape
    assert k_w == input_dim, "weight must be [output_dim, input_dim]"

    out_dtype = pos.dtype
    x2d = pos.reshape(-1, input_dim).astype(compute_dtype)   # flatten leading dims
    w_t = weight.T.astype(compute_dtype)                     # (K, N): one-time transpose
    m = x2d.shape[0]
    itemsize = jnp.dtype(compute_dtype).itemsize

    tm, tk = _pick_tiles(m, input_dim, output_dim, itemsize)
    grid_m = pl.cdiv(m, tm)
    grid_k = input_dim // tk if input_dim % tk == 0 else 1
    if grid_k == 1:
        tk = input_dim

    # Explicit VMEM budget -> raise the scoped limit past v5e's 16 MiB default while
    # staying well inside v7x's 64 MiB physical VMEM.
    est_tile_bytes = ((2 * tm * tk + 2 * tk * output_dim + 2 * tm * output_dim)
                      * itemsize
                      + (tm * output_dim * 4 if grid_k > 1 else 0))
    vmem_limit = max(32 << 20, min(int(est_tile_bytes * 1.5) + (8 << 20), 56 << 20))

    bytes_accessed = (
        m * input_dim * itemsize                         # read x once
        + grid_m * input_dim * output_dim * itemsize     # read W (per row tile at worst)
        + m * output_dim * jnp.dtype(out_dtype).itemsize # write out
    )

    if grid_k == 1:
        kernel = _proj_kernel_fullk
        grid = (grid_m,)
        x_spec = pl.BlockSpec((tm, input_dim), lambda i: (i, 0))
        w_kwargs = {}
        if input_dim * output_dim * itemsize > (4 << 20):
            # Large resident weight with a constant index_map: one buffer is enough.
            w_kwargs["pipeline_mode"] = pl.Buffered(1)
        w_spec = pl.BlockSpec((input_dim, output_dim), lambda i: (0, 0), **w_kwargs)
        out_spec = pl.BlockSpec((tm, output_dim), lambda i: (i, 0))
        scratch = []
        semantics = ("parallel",)
    else:
        kernel = _proj_kernel_ktiled
        grid = (grid_m, grid_k)
        x_spec = pl.BlockSpec((tm, tk), lambda i, kk: (i, kk))
        w_spec = pl.BlockSpec((tk, output_dim), lambda i, kk: (kk, 0))
        out_spec = pl.BlockSpec((tm, output_dim), lambda i, kk: (i, 0))
        scratch = [pltpu.VMEM((tm, output_dim), jnp.float32)]
        semantics = ("parallel", "arbitrary")

    out2d = pl.pallas_call(
        kernel,
        out_shape=jax.ShapeDtypeStruct((m, output_dim), out_dtype),
        grid_spec=pltpu.PrefetchScalarGridSpec(
            num_scalar_prefetch=0,
            grid=grid,
            in_specs=[x_spec, w_spec],
            out_specs=out_spec,
            scratch_shapes=scratch,
        ),
        compiler_params=pltpu.CompilerParams(
            dimension_semantics=semantics,
            vmem_limit_bytes=vmem_limit,
        ),
        cost_estimate=pl.CostEstimate(
            flops=2 * m * input_dim * output_dim,
            transcendentals=0,
            bytes_accessed=bytes_accessed,
        ),
    )(x2d, w_t)

    return out2d.reshape(*lead, output_dim)


if __name__ == "__main__":
    key = jax.random.PRNGKey(0)
    k_pos, k_w = jax.random.split(key)

    batch, seq, input_dim, output_dim = 2, 8, 32, 16

    pos = jax.random.normal(k_pos, (batch, seq, input_dim), dtype=jnp.float32)
    # PyTorch nn.Linear layout: (output_dim, input_dim), bias=False
    weight = jax.random.normal(k_w, (output_dim, input_dim), dtype=jnp.float32) * 0.05

    out = score_projection(pos, weight)
    out = jax.block_until_ready(out)

    # Reference: plain JAX, same semantics as nn.Linear(bias=False).
    ref = jnp.einsum("bsk,nk->bsn", pos, weight)
    assert out.shape == (batch, seq, output_dim)
    assert out.dtype == pos.dtype
    # bf16 compute inside the kernel -> loosen tolerance vs the f32 reference.
    assert jnp.allclose(out, ref, atol=1e-2, rtol=5e-2)

    print("KERNEL_OK")
</pallas_src>

<mosaic_0001>
module attributes {stable_mosaic.version = 11 : i64} {
  func.func @_proj_kernel_fullk(%arg0: i32, %arg1: memref<16x32xbf16, #tpu.memory_space<vmem>>, %arg2: memref<32x16xbf16, #tpu.memory_space<vmem>>, %arg3: memref<16x16xf32, #tpu.memory_space<vmem>>) attributes {dimension_semantics = [#tpu.dimension_semantics<parallel>], iteration_bounds = array<i64: 1>, scalar_prefetch = 0 : i64, scratch_operands = 0 : i64, tpu.core_type = #tpu.core_type<tc>, window_params = [{transform_indices = @transform_0, window_bounds = array<i64: 16, 32>}, {pipeline_mode = #tpu.pipeline_mode<synchronous>, transform_indices = @transform_1, window_bounds = array<i64: 32, 16>}, {transform_indices = @transform_2, window_bounds = array<i64: 16, 16>}]} {
    %c0 = arith.constant 0 : index
    %c0_0 = arith.constant 0 : index
    %0 = vector.load %arg1[%c0, %c0_0] : memref<16x32xbf16, #tpu.memory_space<vmem>>, vector<16x32xbf16>
    %c0_1 = arith.constant 0 : index
    %c0_2 = arith.constant 0 : index
    %1 = vector.load %arg2[%c0_1, %c0_2] : memref<32x16xbf16, #tpu.memory_space<vmem>>, vector<32x16xbf16>
    %cst = arith.constant dense<0.000000e+00> : vector<16x16xf32>
    %2 = tpu.matmul %0, %1, %cst {dimension_numbers = #tpu.dot_dimension_numbers<[1], [0], [0], [1], [0, 0, 1, 1], [], []>} : vector<16x32xbf16>, vector<32x16xbf16>, vector<16x16xf32> -> vector<16x16xf32>
    %c0_3 = arith.constant 0 : index
    %c0_4 = arith.constant 0 : index
    %3 = vector.load %arg3[%c0_3, %c0_4] : memref<16x16xf32, #tpu.memory_space<vmem>>, vector<16x16xf32>
    tpu.vector_store %arg3[%c0_3, %c0_4], %2 {strides = array<i32>} : memref<16x16xf32, #tpu.memory_space<vmem>>, vector<16x16xf32>,
    return
  }
  func.func @transform_0(%arg0: i32) -> (i32, i32) {
    %c0_i32 = arith.constant 0 : i32
    %c0_i32_0 = arith.constant 0 : i32
    return %arg0, %c0_i32 : i32, i32
  }
  func.func @transform_1(%arg0: i32) -> (i32, i32) {
    %c0_i32 = arith.constant 0 : i32
    %c0_i32_0 = arith.constant 0 : i32
    %c0_i32_1 = arith.constant 0 : i32
    return %c0_i32, %c0_i32_0 : i32, i32
  }
  func.func @transform_2(%arg0: i32) -> (i32, i32) {
    %c0_i32 = arith.constant 0 : i32
    %c0_i32_0 = arith.constant 0 : i32
    return %arg0, %c0_i32 : i32, i32
  }
}

</mosaic_0001>

<llo_original>
// kernel: tpu_custom_call.1
$region0: #{tpu_custom_call.1}
  #allocation0 [shape = 'u32[]', space=smem, size = 0x4, offset = 0x4, fixed_abs, tag = 'smem constant byte address 0x4 - core index']
  #allocation1 [shape = 'u32[144,128]{1,0:T(1,128)}', space=vmem, size = 0x12000, scoped, tag = 'internal scratch']
  %s0 = inlined_call_operand.vmem [shape: bf16[16,32], index: 0, kind: input, shape index: {}]
  %s1 = inlined_call_operand.vmem [shape: bf16[32,16], index: 1, kind: input, shape index: {}]
  %s2 = inlined_call_operand.hbm [shape: f32[16,16], index: 2, kind: output, shape index: {}]
  %s3 = sld [smem:[#allocation0]]
  $region18: #{tpu_custom_call.1} parent=0
    _
  %s5 = ssub.s32 1, %s3
  %s6 = scalar_select 0, %s5, %s3
  $region1: #{tpu_custom_call.1} parent=0
    #allocation2 [shape = 'u8[8192]{0}', space=vmem, size = 0x2000, scoped, tag = 'output window, operand 0, single buffered']
    #allocation3 [shape = 's32[1]{0}', space=sflag, size = 0x4, scoped, tag = 'scoped memory for tpu_custom_call.1']
    %7 = vsyncpa [#allocation3], 0
    // Predicated region
    $region2: #{tpu_custom_call.1} parent=1 // pred_check
      _
    $region3: #{tpu_custom_call.1} parent=1 // pred_check_branch
      %9 = sbr.rel (0) target = $region5
    $region4: #{tpu_custom_call.1} parent=1 // pred_region
      _
    $region5: #{tpu_custom_call.1} parent=1 // pred_fallthru
      _
    // Predicated region
    $region6: #{tpu_custom_call.1} parent=1 // pred_check
      _
    $region7: #{tpu_custom_call.1} parent=1 // pred_check_branch
      %11 = sbr.rel (0) target = $region9
    $region8: #{tpu_custom_call.1} parent=1 // pred_region
      _
    $region9: #{tpu_custom_call.1} parent=1 // pred_fallthru
      _
    %v13 = vld [vmem:[%s0] sm:$0xf]
    %v14 = vld [vmem:[%s0 + $0x4] sm:$0xf]
    %v15 = vld [vmem:[%s1] sm:$0xf]
    %v16 = vld [vmem:[%s1 + $0x4] sm:$0xf]
    %v17 = vld [vmem:[%s1 + $0x8] sm:$0xf]
    %v18 = vld [vmem:[%s1 + $0xc] sm:$0xf]
    %v21 = vunpack.c.l.b16 %v13
    %v22 = vunpack.c.l.b16 %v14
    %v23 = vpack.c.b16 %v22, %v21
    %v28 = vunpack.c.l.b16 %v15
    %v29 = vunpack.c.l.b16 %v16
    %v30 = vunpack.c.l.b16 %v17
    %v31 = vunpack.c.l.b16 %v18
    %v32 = vpack.c.b16 %v29, %v28
    %v33 = vpack.c.b16 %v31, %v30
    %vm36 = vcmask 261120
    %v38 = vsel %vm36, %v23, 0
    %40 = vmatprep.subr.bf16.mxu0 0
    %41 = vmatpush1.bf16.msra.mxu0 %v32
    %42 = vmatprep.subr.bf16.mxu0 0
    %43 = vmatpush1.bf16.msra.mxu0 %v33
    %44 = vmatprep.subr.bf16.mxu0 0
    %45 = vmatpush1.bf16.msra.mxu0 0
    %46 = vmatprep.subr.bf16.mxu0 0
    %47 = vmatpush1.bf16.msra.mxu0 0
    %48 = vmatprep.subr.bf16.mxu0 0
    %49 = vmatpush1.bf16.msra.mxu0 0
    %50 = vmatprep.subr.bf16.mxu0 0
    %51 = vmatpush1.bf16.msra.mxu0 0
    %52 = vmatprep.subr.bf16.mxu0 0
    %53 = vmatpush1.bf16.msra.mxu0 0
    %54 = vmatprep.subr.bf16.mxu0 0
    %55 = vmatpush1.bf16.msra.mxu0 0
    %56 = vmatprep.subr.bf16.mxu0 0
    %57 = vmatpush1.bf16.msra.mxu0 0
    %58 = vmatprep.subr.bf16.mxu0 0
    %59 = vmatpush1.bf16.msra.mxu0 0
    %60 = vmatprep.subr.bf16.mxu0 0
    %61 = vmatpush1.bf16.msra.mxu0 0
    %62 = vmatprep.subr.bf16.mxu0 0
    %63 = vmatpush1.bf16.msra.mxu0 0
    %64 = vmatprep.subr.bf16.mxu0 0
    %65 = vmatpush1.bf16.msra.mxu0 0
    %66 = vmatprep.subr.bf16.mxu0 0
    %67 = vmatpush1.bf16.msra.mxu0 0
    %68 = vmatprep.subr.bf16.mxu0 0
    %69 = vmatpush1.bf16.msra.mxu0 0
    %70 = vmatprep.subr.bf16.mxu0 0
    %71 = vmatpush1.bf16.msra.mxu0 0
    %72 = vmatprep.mubr.bf16.mxu0 0
    %73 = vmatmul.mubr.bf16.gmra.mrb[0].mxu0 %v38
    %v74 = vpop.f32.mrb[0].mxu0
    %v75 = vadd.f32 0.0, %v74
    %v76 = vpop.f32.mrb[0].mxu0
    %v77 = vpop.f32.mrb[0].mxu0
    %v78 = vadd.f32 0.0, %v77
    %v79 = vpop.f32.mrb[0].mxu0
    %80 = vdwg.mxu0
    %vm81 = vcmask 130048
    %82 = vst.msk [vmem:[#allocation2] sm:$0xff] %vm81, %v75
    %83 = vst.msk [vmem:[#allocation2 + $0x8] sm:$0xff] %vm81, %v78
    // Predicated region
    $region10: #{tpu_custom_call.1} parent=1 // pred_check
      _
    $region11: #{tpu_custom_call.1} parent=1 // pred_check_branch
      %85 = sbr.rel (0) target = $region13
    $region12: #{tpu_custom_call.1} parent=1 // pred_region
      %s87 = ssub.s32 256, 256
      %88 = vsyncadd [#allocation3], %s87
      %s89 = sshll.u32 [#allocation2], 4
      %s90 = int_to_ptr.vmem [resolvable:$true] %s89
      %95 = dma.vmem_to_hbm [thread:$0]  %s90, 256, %s2, [#allocation3], 128, 128, 8
    $region13: #{tpu_custom_call.1} parent=1 // pred_fallthru
      _
    // Predicated region
    $region14: #{tpu_custom_call.1} parent=1 // pred_check
      _
    $region15: #{tpu_custom_call.1} parent=1 // pred_check_branch
      %97 = sbr.rel (0) target = $region17
    $region16: #{tpu_custom_call.1} parent=1 // pred_region
      %98 = dma.done [#allocation3], 256
    $region17: #{tpu_custom_call.1} parent=1 // pred_fallthru
      _
    %99 = vsyncpa [#allocation3], 1

</llo_original>
